<compile_context>
chip_gen: v5e
topology: v5e:2x2
jax: 0.10.0
libtpu: 0.0.40
codegen_flags: <defaults>
</compile_context>

<pallas_src>
import jax
import jax.numpy as jnp
from jax import lax
from jax.experimental import pallas as pl
from jax.experimental.pallas import tpu as pltpu


def _round_up(n: int, m: int) -> int:
    return -(-n // m) * m


# "contract dim 1 of lhs with dim 1 of rhs" == x @ W.T without materializing
# the transpose; Mosaic handles the transposed contraction on the MXU.
_DN_NT = (((1,), (1,)), ((), ()))


def _mlp_kernel(x_ref, w1_ref, w2_ref, o_ref):
    # h = x @ W1.T : (tb, Hp), f32 accumulation on the MXU.
    h = lax.dot_general(x_ref[...], w1_ref[...], _DN_NT,
                        preferred_element_type=jnp.float32)
    # NOTE: h lives in vregs between the two dots; for very large tb*Hp add a
    # grid axis over H with a VMEM accumulator instead of one fused expression.
    # out = h @ W2.T : (tb, Op).  Cast h to the weight dtype so a bf16 weight
    # path stays bf16 on the MXU (no-op for the default f32 path).
    o_ref[...] = lax.dot_general(h.astype(w2_ref.dtype), w2_ref[...], _DN_NT,
                                 preferred_element_type=jnp.float32
                                 ).astype(o_ref.dtype)


def _mlp_bias_kernel(x_ref, w1_ref, w2_ref, b1_ref, b2_ref, o_ref):
    h = lax.dot_general(x_ref[...], w1_ref[...], _DN_NT,
                        preferred_element_type=jnp.float32)
    h = h + b1_ref[...]                       # (tb, Hp) + (1, Hp) broadcast
    out = lax.dot_general(h.astype(w2_ref.dtype), w2_ref[...], _DN_NT,
                          preferred_element_type=jnp.float32)
    o_ref[...] = (out + b2_ref[...]).astype(o_ref.dtype)


def linear_model_nt(x, W1, W2, b1=None, b2=None, *, tb=None,
                    compute_dtype=None, pad_lanes=True):
    """Pallas implementation of LinearModel_NT.forward.

    x:  (B, D_in)      W1: (H, D_in)      W2: (O, H)   (torch out x in layout)
    b1: (H,) or None   b2: (O,) or None
    compute_dtype: e.g. jnp.bfloat16 for MXU-native inputs (f32 accumulation).
    """
    B, D_in = x.shape
    H, d1 = W1.shape
    O, h2 = W2.shape
    assert d1 == D_in and h2 == H, "weight shapes inconsistent with x"
    out_dtype = x.dtype

    if compute_dtype is not None:
        x = x.astype(compute_dtype)
        W1 = W1.astype(compute_dtype)
        W2 = W2.astype(compute_dtype)

    # ---- lane-dense padding of H / O (one-time weight prep in practice) ----
    H_p = _round_up(H, 128) if pad_lanes else H
    O_p = _round_up(O, 128) if pad_lanes else O
    if H_p != H:
        W1 = jnp.pad(W1, ((0, H_p - H), (0, 0)))
        W2 = jnp.pad(W2, ((0, 0), (0, H_p - H)))
    if O_p != O:
        W2 = jnp.pad(W2, ((0, O_p - O), (0, 0)))

    use_bias = (b1 is not None) or (b2 is not None)
    if use_bias:
        b1 = jnp.zeros((H,), jnp.float32) if b1 is None else b1
        b2 = jnp.zeros((O,), jnp.float32) if b2 is None else b2
        b1 = jnp.pad(b1.astype(jnp.float32), (0, H_p - H)).reshape(1, H_p)
        b2 = jnp.pad(b2.astype(jnp.float32), (0, O_p - O)).reshape(1, O_p)

    # ---- batch tiling ----
    if tb is None:
        # Small B: one grid step (kernel is overhead-bound; extra steps cost
        # ~0.35 us each).  Large B: 256-row tiles for v6e/v7x MXUs + megacore.
        tb = B if B <= 256 else 256
    tb = min(tb, B)
    if tb != B and tb % 8 != 0:
        raise ValueError("tb must be a multiple of 8 (f32 sublane) or equal B")
    B_p = _round_up(B, tb)
    if B_p != B:
        x = jnp.pad(x, ((0, B_p - B), (0, 0)))

    # ---- VMEM budget (only set when above the 32 MiB default scoped limit;
    #      matters for v7x's 64 MiB VMEM at large shapes) ----
    isz = jnp.dtype(x.dtype).itemsize
    osz = jnp.dtype(out_dtype).itemsize
    vmem_est = (2 * tb * D_in * isz          # double-buffered x tiles
                + 2 * H_p * D_in * isz       # W1 (constant index_map)
                + 2 * O_p * H_p * isz        # W2
                + 2 * tb * O_p * osz         # double-buffered out tiles
                + (4 << 20))                 # headroom
    vmem_limit = int(min(vmem_est, 100 << 20)) if vmem_est > (32 << 20) else None

    if use_bias:
        kernel = _mlp_bias_kernel
        extra_in = (b1, b2)
        extra_specs = [pl.BlockSpec((1, H_p), lambda i: (0, 0)),
                       pl.BlockSpec((1, O_p), lambda i: (0, 0))]
    else:
        kernel = _mlp_kernel
        extra_in = ()
        extra_specs = []

    out = pl.pallas_call(
        kernel,
        out_shape=jax.ShapeDtypeStruct((B_p, O_p), out_dtype),
        grid_spec=pltpu.PrefetchScalarGridSpec(
            num_scalar_prefetch=0,
            grid=(B_p // tb,),
            in_specs=[
                pl.BlockSpec((tb, D_in), lambda i: (i, 0)),
                # Constant index_map -> weights fetched once, resident in VMEM
                # across all batch tiles.  (On v7x with very large weights,
                # pipeline_mode=pl.Buffered(1) here would halve their
                # footprint since they never change.)
                pl.BlockSpec((H_p, D_in), lambda i: (0, 0)),
                pl.BlockSpec((O_p, H_p), lambda i: (0, 0)),
            ] + extra_specs,
            out_specs=pl.BlockSpec((tb, O_p), lambda i: (i, 0)),
        ),
        compiler_params=pltpu.CompilerParams(
            dimension_semantics=("parallel",),
            vmem_limit_bytes=vmem_limit),
    )(x, W1, W2, *extra_in)

    if B_p != B or O_p != O:
        out = out[:B, :O]
    return out


if __name__ == "__main__":
    # Module config: input_shape=32, hidden_units=64, output_shape=16; batch=8.
    B, D_IN, HID, D_OUT = 8, 32, 64, 16

    key = jax.random.PRNGKey(0)
    kx, k1, k2 = jax.random.split(key, 3)
    x = jax.random.normal(kx, (B, D_IN), dtype=jnp.float32)
    W1 = jax.random.normal(k1, (HID, D_IN), dtype=jnp.float32)   # (hidden, input)
    W2 = jax.random.normal(k2, (D_OUT, HID), dtype=jnp.float32)  # (output, hidden)

    # use_bias=False (module default)
    out = jax.block_until_ready(linear_model_nt(x, W1, W2))
    ref = (x @ W1.T) @ W2.T
    assert out.shape == (B, D_OUT)
    assert jnp.allclose(out, ref, atol=1e-3, rtol=1e-3), "mismatch (no bias)"

    # use_bias=True path
    kb1, kb2 = jax.random.split(jax.random.PRNGKey(1), 2)
    b1 = jax.random.normal(kb1, (HID,), dtype=jnp.float32)
    b2 = jax.random.normal(kb2, (D_OUT,), dtype=jnp.float32)
    out_b = jax.block_until_ready(linear_model_nt(x, W1, W2, b1, b2))
    ref_b = (x @ W1.T + b1) @ W2.T + b2
    assert out_b.shape == (B, D_OUT)
    assert jnp.allclose(out_b, ref_b, atol=1e-3, rtol=1e-3), "mismatch (bias)"

    print("KERNEL_OK")
</pallas_src>

<mosaic_0001>
module attributes {stable_mosaic.version = 11 : i64} {
  func.func @_mlp_kernel(%arg0: i32, %arg1: memref<8x32xf32, #tpu.memory_space<vmem>>, %arg2: memref<128x32xf32, #tpu.memory_space<vmem>>, %arg3: memref<128x128xf32, #tpu.memory_space<vmem>>, %arg4: memref<8x128xf32, #tpu.memory_space<vmem>>) attributes {dimension_semantics = [#tpu.dimension_semantics<parallel>], iteration_bounds = array<i64: 1>, scalar_prefetch = 0 : i64, scratch_operands = 0 : i64, tpu.core_type = #tpu.core_type<tc>, window_params = [{transform_indices = @transform_0, window_bounds = array<i64: 8, 32>}, {pipeline_mode = #tpu.pipeline_mode<synchronous>, transform_indices = @transform_1, window_bounds = array<i64: 128, 32>}, {pipeline_mode = #tpu.pipeline_mode<synchronous>, transform_indices = @transform_2, window_bounds = array<i64: 128, 128>}, {transform_indices = @transform_3, window_bounds = array<i64: 8, 128>}]} {
    %c0 = arith.constant 0 : index
    %c0_0 = arith.constant 0 : index
    %0 = vector.load %arg1[%c0, %c0_0] : memref<8x32xf32, #tpu.memory_space<vmem>>, vector<8x32xf32>
    %c0_1 = arith.constant 0 : index
    %c0_2 = arith.constant 0 : index
    %1 = vector.load %arg2[%c0_1, %c0_2] : memref<128x32xf32, #tpu.memory_space<vmem>>, vector<128x32xf32>
    %cst = arith.constant dense<0.000000e+00> : vector<8x128xf32>
    %2 = tpu.matmul %0, %1, %cst {dimension_numbers = #tpu.dot_dimension_numbers<[1], [1], [0], [0], [0, 0, 1, 0], [], []>} : vector<8x32xf32>, vector<128x32xf32>, vector<8x128xf32> -> vector<8x128xf32>
    %c0_3 = arith.constant 0 : index
    %c0_4 = arith.constant 0 : index
    %3 = vector.load %arg3[%c0_3, %c0_4] : memref<128x128xf32, #tpu.memory_space<vmem>>, vector<128x128xf32>
    %cst_5 = arith.constant dense<0.000000e+00> : vector<8x128xf32>
    %4 = tpu.matmul %2, %3, %cst_5 {dimension_numbers = #tpu.dot_dimension_numbers<[1], [1], [0], [0], [0, 0, 1, 0], [], []>} : vector<8x128xf32>, vector<128x128xf32>, vector<8x128xf32> -> vector<8x128xf32>
    %c0_6 = arith.constant 0 : index
    %c0_7 = arith.constant 0 : index
    %5 = vector.load %arg4[%c0_6, %c0_7] : memref<8x128xf32, #tpu.memory_space<vmem>>, vector<8x128xf32>
    tpu.vector_store %arg4[%c0_6, %c0_7], %4 {strides = array<i32>} : memref<8x128xf32, #tpu.memory_space<vmem>>, vector<8x128xf32>,
    return
  }
  func.func @transform_0(%arg0: i32) -> (i32, i32) {
    %c0_i32 = arith.constant 0 : i32
    %c0_i32_0 = arith.constant 0 : i32
    return %arg0, %c0_i32 : i32, i32
  }
  func.func @transform_1(%arg0: i32) -> (i32, i32) {
    %c0_i32 = arith.constant 0 : i32
    %c0_i32_0 = arith.constant 0 : i32
    %c0_i32_1 = arith.constant 0 : i32
    return %c0_i32, %c0_i32_0 : i32, i32
  }
  func.func @transform_2(%arg0: i32) -> (i32, i32) {
    %c0_i32 = arith.constant 0 : i32
    %c0_i32_0 = arith.constant 0 : i32
    %c0_i32_1 = arith.constant 0 : i32
    return %c0_i32, %c0_i32_0 : i32, i32
  }
  func.func @transform_3(%arg0: i32) -> (i32, i32) {
    %c0_i32 = arith.constant 0 : i32
    %c0_i32_0 = arith.constant 0 : i32
    return %arg0, %c0_i32 : i32, i32
  }
}

</mosaic_0001>

<llo_original>
// kernel: tpu_custom_call.1
$region0: #{tpu_custom_call.1}
  #allocation0 [shape = 'u32[]', space=smem, size = 0x4, offset = 0x4, fixed_abs, tag = 'smem constant byte address 0x4 - core index']
  #allocation1 [shape = 'u32[72,128]{1,0:T(1,128)}', space=vmem, size = 0x9000, scoped, tag = 'internal scratch']
  %s0 = inlined_call_operand.vmem [shape: f32[8,32], index: 0, kind: input, shape index: {}]
  %s1 = inlined_call_operand.vmem [shape: f32[128,32], index: 1, kind: input, shape index: {}]
  %s2 = inlined_call_operand.vmem [shape: f32[128,128], index: 2, kind: input, shape index: {}]
  %s3 = inlined_call_operand.hbm [shape: f32[8,128], index: 3, kind: output, shape index: {}]
  %s4 = sld [smem:[#allocation0]]
  $region22: #{tpu_custom_call.1} parent=0
    _
  %s6 = ssub.s32 1, %s4
  %s7 = scalar_select 0, %s6, %s4
  $region1: #{tpu_custom_call.1} parent=0
    #allocation2 [shape = 'u8[4096]{0}', space=vmem, size = 0x1000, scoped, tag = 'output window, operand 0, single buffered']
    #allocation3 [shape = 's32[1]{0}', space=sflag, size = 0x4, scoped, tag = 'scoped memory for tpu_custom_call.1']
    %8 = vsyncpa [#allocation3], 0
    // Predicated region
    $region2: #{tpu_custom_call.1} parent=1 // pred_check
      _
    $region3: #{tpu_custom_call.1} parent=1 // pred_check_branch
      %10 = sbr.rel (0) target = $region5
    $region4: #{tpu_custom_call.1} parent=1 // pred_region
      _
    $region5: #{tpu_custom_call.1} parent=1 // pred_fallthru
      _
    // Predicated region
    $region6: #{tpu_custom_call.1} parent=1 // pred_check
      _
    $region7: #{tpu_custom_call.1} parent=1 // pred_check_branch
      %12 = sbr.rel (0) target = $region9
    $region8: #{tpu_custom_call.1} parent=1 // pred_region
      _
    $region9: #{tpu_custom_call.1} parent=1 // pred_fallthru
      _
    // Predicated region
    $region10: #{tpu_custom_call.1} parent=1 // pred_check
      _
    $region11: #{tpu_custom_call.1} parent=1 // pred_check_branch
      %14 = sbr.rel (0) target = $region13
    $region12: #{tpu_custom_call.1} parent=1 // pred_region
      _
    $region13: #{tpu_custom_call.1} parent=1 // pred_fallthru
      _
    %v15 = vld [vmem:[%s0] sm:$0xff]
    %v16 = vld [vmem:[%s1] sm:$0xff]
    %v17 = vld [vmem:[%s1 + $0x8] sm:$0xff]
    %v18 = vld [vmem:[%s1 + $0x10] sm:$0xff]
    %v19 = vld [vmem:[%s1 + $0x18] sm:$0xff]
    %v20 = vld [vmem:[%s1 + $0x20] sm:$0xff]
    %v21 = vld [vmem:[%s1 + $0x28] sm:$0xff]
    %v22 = vld [vmem:[%s1 + $0x30] sm:$0xff]
    %v23 = vld [vmem:[%s1 + $0x38] sm:$0xff]
    %v24 = vld [vmem:[%s1 + $0x40] sm:$0xff]
    %v25 = vld [vmem:[%s1 + $0x48] sm:$0xff]
    %v26 = vld [vmem:[%s1 + $0x50] sm:$0xff]
    %v27 = vld [vmem:[%s1 + $0x58] sm:$0xff]
    %v28 = vld [vmem:[%s1 + $0x60] sm:$0xff]
    %v29 = vld [vmem:[%s1 + $0x68] sm:$0xff]
    %v30 = vld [vmem:[%s1 + $0x70] sm:$0xff]
    %v31 = vld [vmem:[%s1 + $0x78] sm:$0xff]
    %vm32 = vcmask 261120
    %v34 = vsel %vm32, %v15, 0
    %v37 = vsel %vm32, %v16, 0
    %v40 = vsel %vm32, %v17, 0
    %v43 = vsel %vm32, %v18, 0
    %v46 = vsel %vm32, %v19, 0
    %v49 = vsel %vm32, %v20, 0
    %v52 = vsel %vm32, %v21, 0
    %v55 = vsel %vm32, %v22, 0
    %v58 = vsel %vm32, %v23, 0
    %v61 = vsel %vm32, %v24, 0
    %v64 = vsel %vm32, %v25, 0
    %v67 = vsel %vm32, %v26, 0
    %v70 = vsel %vm32, %v27, 0
    %v73 = vsel %vm32, %v28, 0
    %v76 = vsel %vm32, %v29, 0
    %v79 = vsel %vm32, %v30, 0
    %v82 = vsel %vm32, %v31, 0
    %84 = vmatpush.xpose.msra.mxu0 %v82
    %85 = vmatpush.xpose.msra.mxu0 %v79
    %86 = vmatpush.xpose.msra.mxu0 %v76
    %87 = vmatpush.xpose.msra.mxu0 %v73
    %88 = vmatpush.xpose.msra.mxu0 %v70
    %89 = vmatpush.xpose.msra.mxu0 %v67
    %90 = vmatpush.xpose.msra.mxu0 %v64
    %91 = vmatpush.xpose.msra.mxu0 %v61
    %92 = vmatpush.xpose.msra.mxu0 %v58
    %93 = vmatpush.xpose.msra.mxu0 %v55
    %94 = vmatpush.xpose.msra.mxu0 %v52
    %95 = vmatpush.xpose.msra.mxu0 %v49
    %96 = vmatpush.xpose.msra.mxu0 %v46
    %97 = vmatpush.xpose.msra.mxu0 %v43
    %98 = vmatpush.xpose.msra.mxu0 %v40
    %99 = vmatpush.xpose.msra.mxu0 %v37
    %100 = vmatmul.f32.gmra.mxu0 %v34
    %v101 = vpop.f32.mrf.mxu0
    %v102 = vadd.f32 0.0, %v101
    %103 = vdwg.mxu0
    %v104 = vld [vmem:[%s2] sm:$0xff]
    %v105 = vld [vmem:[%s2 + $0x8] sm:$0xff]
    %v106 = vld [vmem:[%s2 + $0x10] sm:$0xff]
    %v107 = vld [vmem:[%s2 + $0x18] sm:$0xff]
    %v108 = vld [vmem:[%s2 + $0x20] sm:$0xff]
    %v109 = vld [vmem:[%s2 + $0x28] sm:$0xff]
    %v110 = vld [vmem:[%s2 + $0x30] sm:$0xff]
    %v111 = vld [vmem:[%s2 + $0x38] sm:$0xff]
    %v112 = vld [vmem:[%s2 + $0x40] sm:$0xff]
    %v113 = vld [vmem:[%s2 + $0x48] sm:$0xff]
    %v114 = vld [vmem:[%s2 + $0x50] sm:$0xff]
    %v115 = vld [vmem:[%s2 + $0x58] sm:$0xff]
    %v116 = vld [vmem:[%s2 + $0x60] sm:$0xff]
    %v117 = vld [vmem:[%s2 + $0x68] sm:$0xff]
    %v118 = vld [vmem:[%s2 + $0x70] sm:$0xff]
    %v119 = vld [vmem:[%s2 + $0x78] sm:$0xff]
    %120 = vmatpush.xpose.msra.mxu0 %v119
    %121 = vmatpush.xpose.msra.mxu0 %v118
    %122 = vmatpush.xpose.msra.mxu0 %v117
    %123 = vmatpush.xpose.msra.mxu0 %v116
    %124 = vmatpush.xpose.msra.mxu0 %v115
    %125 = vmatpush.xpose.msra.mxu0 %v114
    %126 = vmatpush.xpose.msra.mxu0 %v113
    %127 = vmatpush.xpose.msra.mxu0 %v112
    %128 = vmatpush.xpose.msra.mxu0 %v111
    %129 = vmatpush.xpose.msra.mxu0 %v110
    %130 = vmatpush.xpose.msra.mxu0 %v109
    %131 = vmatpush.xpose.msra.mxu0 %v108
    %132 = vmatpush.xpose.msra.mxu0 %v107
    %133 = vmatpush.xpose.msra.mxu0 %v106
    %134 = vmatpush.xpose.msra.mxu0 %v105
    %135 = vmatpush.xpose.msra.mxu0 %v104
    %136 = vmatmul.f32.gmra.mxu0 %v102
    %v137 = vpop.f32.mrf.mxu0
    %v138 = vadd.f32 0.0, %v137
    %139 = vdwg.mxu0
    %140 = vst [vmem:[#allocation2] sm:$0xff] %v138
    // Predicated region
    $region14: #{tpu_custom_call.1} parent=1 // pred_check
      _
    $region15: #{tpu_custom_call.1} parent=1 // pred_check_branch
      %142 = sbr.rel (0) target = $region17
    $region16: #{tpu_custom_call.1} parent=1 // pred_region
      %144 = vsyncadd [#allocation3], 0
      %s146 = sshll.u32 [#allocation2], 4
      %s147 = int_to_ptr.vmem [resolvable:$true] %s146
      %s148 = sshll.u32 %s3, 4
      %s149 = int_to_ptr.hbm [resolvable:$true] %s148
      %151 = dma.vmem_to_hbm [thread:$0]  %s147, 128, %s149, [#allocation3]
    $region17: #{tpu_custom_call.1} parent=1 // pred_fallthru
      _
    // Predicated region
    $region18: #{tpu_custom_call.1} parent=1 // pred_check
      _
    $region19: #{tpu_custom_call.1} parent=1 // pred_check_branch
      %153 = sbr.rel (0) target = $region21
    $region20: #{tpu_custom_call.1} parent=1 // pred_region
      %155 = dma.done [#allocation3], 128
    $region21: #{tpu_custom_call.1} parent=1 // pred_fallthru
      _
    %156 = vsyncpa [#allocation3], 1

</llo_original>
